<compile_context>
chip_gen: v6e
topology: v6e:2x2x1
jax: 0.10.0
libtpu: 0.0.40
codegen_flags: <defaults>
</compile_context>

<pallas_src>
import functools

import jax
import jax.numpy as jnp
import numpy as np
from jax import lax
from jax.experimental import pallas as pl
from jax.experimental.pallas import tpu as pltpu


def _convt_kernel(x_ref, w_ref, b_ref, o_ref, xpad_ref, im_ref, *,
                  nb, cin, h, w, k, pad, wpad, out_pad):
    # x_ref   : (N*Cin, H*W)          unpadded input, spatial rows flattened
    # w_ref   : (Cout, K*K*Cin)       spatially flipped weights, im2col layout
    # b_ref   : (Cout, 1)
    # o_ref   : (N, Cout, out_pad)    out_pad = round_up(Ho*Wpad, 128); the
    #                                 overcompute columns are sliced off outside
    # xpad_ref: (N*Cin, Hpad*Wpad)    VMEM scratch: zero-padded planes, flattened
    # im_ref  : (K*K*Cin, N*out_pad)  VMEM scratch: im2col stack

    # --- 1) Build the zero-padded planes in VMEM (replaces wrapper jnp.pad). --
    xpad_ref[...] = jnp.zeros_like(xpad_ref)
    for r in range(h):
        dst = (pad + r) * wpad + pad
        xpad_ref[:, dst:dst + w] = x_ref[:, r * w:(r + 1) * w]

    # --- 2) im2col: each (kh,kw) tap is ONE contiguous lane slice of the padded
    #        plane (constant-shift trick: output row stride == wpad).  Every
    #        shift is done exactly once, back-to-back, no matmul interleave. ---
    for kh in range(k):
        for kw in range(k):
            tap = kh * k + kw
            off = kh * wpad + kw            # 0 .. (k-1)*(wpad+1), all static
            for bi in range(nb):
                im_ref[tap * cin:(tap + 1) * cin,
                       bi * out_pad:(bi + 1) * out_pad] = (
                    xpad_ref[bi * cin:(bi + 1) * cin, off:off + out_pad])

    # --- 3) Single MXU matmul for the whole batch:
    #        (Cout, K*K*Cin) @ (K*K*Cin, N*out_pad), f32 accumulate. ---
    res = jnp.dot(w_ref[...], im_ref[...], preferred_element_type=jnp.float32)

    # --- 4) Bias + store; per-batch lane slices start at multiples of 128,
    #        out_pad is a multiple of 128 -> dense unmasked stores. ---
    for bi in range(nb):
        o_ref[bi] = (res[:, bi * out_pad:(bi + 1) * out_pad]
                     + b_ref[...]).astype(o_ref.dtype)


@jax.jit
def conv_transpose2d(x_nchw, weight, bias):
    """ConvTranspose2d with the Model defaults (stride=1, padding=0,
    output_padding=0, dilation=1, groups=1).  weight is the PyTorch layout
    (Cin, Cout, K, K); x is NCHW."""
    n, cin, h, w = x_nchw.shape
    cout, k = weight.shape[1], weight.shape[2]
    pad = k - 1
    ho, wo = h + pad, w + pad
    wpad = w + 2 * pad                      # padded row width (= full-conv width)
    out_len = ho * wpad                     # real lane-dense output length
    out_pad = pl.cdiv(out_len, 128) * 128   # round up -> unmasked output stores
    max_off = pad * wpad + pad              # largest tap offset (kh = kw = K-1)
    # Enough bottom zero-rows that every tap's out_pad-wide lane slice stays in
    # bounds of the VMEM scratch (no runtime OOB check -- do NOT shrink this).
    hpad = max(h + 2 * pad, pl.cdiv(max_off + out_pad, wpad))
    hpwp = hpad * wpad
    assert max_off + out_pad <= hpwp

    # Wrapper-side plumbing: free/near-free reshapes + a tiny weight transform.
    x2d = x_nchw.reshape(n * cin, h * w)
    # wflat[co, (kh*K+kw)*Cin + ci] = W[ci, co, K-1-kh, K-1-kw]
    wflat = jnp.transpose(weight[:, :, ::-1, ::-1],
                          (1, 2, 3, 0)).reshape(cout, k * k * cin)
    b2 = bias.reshape(cout, 1)

    kern = functools.partial(_convt_kernel, nb=n, cin=cin, h=h, w=w, k=k,
                             pad=pad, wpad=wpad, out_pad=out_pad)
    out_flat = pl.pallas_call(
        kern,
        out_shape=jax.ShapeDtypeStruct((n, cout, out_pad), x_nchw.dtype),
        grid=(1,),                          # whole batch in one invocation
        in_specs=[
            pl.BlockSpec((n * cin, h * w), lambda i: (0, 0)),
            pl.BlockSpec((cout, k * k * cin), lambda i: (0, 0)),
            pl.BlockSpec((cout, 1), lambda i: (0, 0)),
        ],
        out_specs=pl.BlockSpec((n, cout, out_pad), lambda i: (0, 0, 0)),
        scratch_shapes=[
            pltpu.VMEM((n * cin, hpwp), x_nchw.dtype),        # padded planes
            pltpu.VMEM((k * k * cin, n * out_pad), x_nchw.dtype),  # im2col
        ],
        compiler_params=pltpu.CompilerParams(
            dimension_semantics=("arbitrary",)),
    )(x2d, wflat, b2)

    # (N, Cout, out_pad) -> drop lane padding -> (N, Cout, Ho, Wpad) -> drop the
    # constant-shift overcompute columns.  One small fused copy in XLA.
    return out_flat[:, :, :out_len].reshape(n, cout, ho, wpad)[:, :, :, :wo]


def reference(x_nchw, weight, bias):
    """XLA reference: transposed conv as a full conv with flipped kernel."""
    k = weight.shape[2]
    w_oihw = jnp.transpose(weight[:, :, ::-1, ::-1], (1, 0, 2, 3))
    y = lax.conv_general_dilated(
        x_nchw, w_oihw, window_strides=(1, 1),
        padding=[(k - 1, k - 1), (k - 1, k - 1)],
        dimension_numbers=("NCHW", "OIHW", "NCHW"))
    return y + bias.reshape(1, -1, 1, 1)


if __name__ == "__main__":
    key = jax.random.PRNGKey(0)
    k_x, k_w, k_b = jax.random.split(key, 3)

    N, Cin, H, W = 2, 3, 16, 16
    Cout, K = 6, 3

    x = jax.random.normal(k_x, (N, Cin, H, W), dtype=jnp.float32)
    # PyTorch-style init: U(-bound, bound), bound = 1/sqrt(Cin*K*K)
    bound = 1.0 / np.sqrt(Cin * K * K)
    weight = jax.random.uniform(k_w, (Cin, Cout, K, K),
                                minval=-bound, maxval=bound, dtype=jnp.float32)
    bias = jax.random.uniform(k_b, (Cout,),
                              minval=-bound, maxval=bound, dtype=jnp.float32)

    out = jax.block_until_ready(conv_transpose2d(x, weight, bias))
    ref = jax.block_until_ready(reference(x, weight, bias))

    assert out.shape == (N, Cout, H + K - 1, W + K - 1), out.shape
    np.testing.assert_allclose(np.asarray(out), np.asarray(ref),
                               rtol=1e-5, atol=1e-5)
    print("KERNEL_OK")
</pallas_src>

<mosaic_0001>
module attributes {stable_mosaic.version = 11 : i64} {
  func.func @_convt_kernel(%arg0: i32, %arg1: memref<6x256xf32, #tpu.memory_space<vmem>>, %arg2: memref<6x27xf32, #tpu.memory_space<vmem>>, %arg3: memref<6x1xf32, #tpu.memory_space<vmem>>, %arg4: memref<2x6x384xf32, #tpu.memory_space<vmem>>, %arg5: memref<6x440xf32, #tpu.memory_space<vmem>>, %arg6: memref<27x768xf32, #tpu.memory_space<vmem>>) attributes {dimension_semantics = [#tpu.dimension_semantics<arbitrary>], iteration_bounds = array<i64: 1>, scalar_prefetch = 0 : i64, scratch_operands = 2 : i64, tpu.core_type = #tpu.core_type<tc>, window_params = [{pipeline_mode = #tpu.pipeline_mode<synchronous>, transform_indices = @transform_0, window_bounds = array<i64: 6, 256>}, {pipeline_mode = #tpu.pipeline_mode<synchronous>, transform_indices = @transform_1, window_bounds = array<i64: 6, 27>}, {pipeline_mode = #tpu.pipeline_mode<synchronous>, transform_indices = @transform_2, window_bounds = array<i64: 6, 1>}, {pipeline_mode = #tpu.pipeline_mode<synchronous>, transform_indices = @transform_3, window_bounds = array<i64: 2, 6, 384>}]} {
    %cst = arith.constant 0.000000e+00 : f32
    %0 = vector.broadcast %cst : f32 to vector<6x440xf32>
    %c0 = arith.constant 0 : index
    %c0_0 = arith.constant 0 : index
    %1 = vector.load %arg5[%c0, %c0_0] : memref<6x440xf32, #tpu.memory_space<vmem>>, vector<6x440xf32>
    tpu.vector_store %arg5[%c0, %c0_0], %0 {strides = array<i32>} : memref<6x440xf32, #tpu.memory_space<vmem>>, vector<6x440xf32>,
    %c0_1 = arith.constant 0 : index
    %c0_2 = arith.constant 0 : index
    %2 = vector.load %arg1[%c0_1, %c0_2] : memref<6x256xf32, #tpu.memory_space<vmem>>, vector<6x16xf32>
    %c0_3 = arith.constant 0 : index
    %c42 = arith.constant 42 : index
    %3 = vector.load %arg5[%c0_3, %c42] : memref<6x440xf32, #tpu.memory_space<vmem>>, vector<6x16xf32>
    tpu.vector_store %arg5[%c0_3, %c42], %2 {strides = array<i32>} : memref<6x440xf32, #tpu.memory_space<vmem>>, vector<6x16xf32>,
    %c0_4 = arith.constant 0 : index
    %c16 = arith.constant 16 : index
    %4 = vector.load %arg1[%c0_4, %c16] : memref<6x256xf32, #tpu.memory_space<vmem>>, vector<6x16xf32>
    %c0_5 = arith.constant 0 : index
    %c62 = arith.constant 62 : index
    %5 = vector.load %arg5[%c0_5, %c62] : memref<6x440xf32, #tpu.memory_space<vmem>>, vector<6x16xf32>
    tpu.vector_store %arg5[%c0_5, %c62], %4 {strides = array<i32>} : memref<6x440xf32, #tpu.memory_space<vmem>>, vector<6x16xf32>,
    %c0_6 = arith.constant 0 : index
    %c32 = arith.constant 32 : index
    %6 = vector.load %arg1[%c0_6, %c32] : memref<6x256xf32, #tpu.memory_space<vmem>>, vector<6x16xf32>
    %c0_7 = arith.constant 0 : index
    %c82 = arith.constant 82 : index
    %7 = vector.load %arg5[%c0_7, %c82] : memref<6x440xf32, #tpu.memory_space<vmem>>, vector<6x16xf32>
    tpu.vector_store %arg5[%c0_7, %c82], %6 {strides = array<i32>} : memref<6x440xf32, #tpu.memory_space<vmem>>, vector<6x16xf32>,
    %c0_8 = arith.constant 0 : index
    %c48 = arith.constant 48 : index
    %8 = vector.load %arg1[%c0_8, %c48] : memref<6x256xf32, #tpu.memory_space<vmem>>, vector<6x16xf32>
    %c0_9 = arith.constant 0 : index
    %c102 = arith.constant 102 : index
    %9 = vector.load %arg5[%c0_9, %c102] : memref<6x440xf32, #tpu.memory_space<vmem>>, vector<6x16xf32>
    tpu.vector_store %arg5[%c0_9, %c102], %8 {strides = array<i32>} : memref<6x440xf32, #tpu.memory_space<vmem>>, vector<6x16xf32>,
    %c0_10 = arith.constant 0 : index
    %c64 = arith.constant 64 : index
    %10 = vector.load %arg1[%c0_10, %c64] : memref<6x256xf32, #tpu.memory_space<vmem>>, vector<6x16xf32>
    %c0_11 = arith.constant 0 : index
    %c122 = arith.constant 122 : index
    %11 = vector.load %arg5[%c0_11, %c122] : memref<6x440xf32, #tpu.memory_space<vmem>>, vector<6x16xf32>
    tpu.vector_store %arg5[%c0_11, %c122], %10 {strides = array<i32>} : memref<6x440xf32, #tpu.memory_space<vmem>>, vector<6x16xf32>,
    %c0_12 = arith.constant 0 : index
    %c80 = arith.constant 80 : index
    %12 = vector.load %arg1[%c0_12, %c80] : memref<6x256xf32, #tpu.memory_space<vmem>>, vector<6x16xf32>
    %c0_13 = arith.constant 0 : index
    %c142 = arith.constant 142 : index
    %13 = vector.load %arg5[%c0_13, %c142] : memref<6x440xf32, #tpu.memory_space<vmem>>, vector<6x16xf32>
    tpu.vector_store %arg5[%c0_13, %c142], %12 {strides = array<i32>} : memref<6x440xf32, #tpu.memory_space<vmem>>, vector<6x16xf32>,
    %c0_14 = arith.constant 0 : index
    %c96 = arith.constant 96 : index
    %14 = vector.load %arg1[%c0_14, %c96] : memref<6x256xf32, #tpu.memory_space<vmem>>, vector<6x16xf32>
    %c0_15 = arith.constant 0 : index
    %c162 = arith.constant 162 : index
    %15 = vector.load %arg5[%c0_15, %c162] : memref<6x440xf32, #tpu.memory_space<vmem>>, vector<6x16xf32>
    tpu.vector_store %arg5[%c0_15, %c162], %14 {strides = array<i32>} : memref<6x440xf32, #tpu.memory_space<vmem>>, vector<6x16xf32>,
    %c0_16 = arith.constant 0 : index
    %c112 = arith.constant 112 : index
    %16 = vector.load %arg1[%c0_16, %c112] : memref<6x256xf32, #tpu.memory_space<vmem>>, vector<6x16xf32>
    %c0_17 = arith.constant 0 : index
    %c182 = arith.constant 182 : index
    %17 = vector.load %arg5[%c0_17, %c182] : memref<6x440xf32, #tpu.memory_space<vmem>>, vector<6x16xf32>
    tpu.vector_store %arg5[%c0_17, %c182], %16 {strides = array<i32>} : memref<6x440xf32, #tpu.memory_space<vmem>>, vector<6x16xf32>,
    %c0_18 = arith.constant 0 : index
    %c128 = arith.constant 128 : index
    %18 = vector.load %arg1[%c0_18, %c128] : memref<6x256xf32, #tpu.memory_space<vmem>>, vector<6x16xf32>
    %c0_19 = arith.constant 0 : index
    %c202 = arith.constant 202 : index
    %19 = vector.load %arg5[%c0_19, %c202] : memref<6x440xf32, #tpu.memory_space<vmem>>, vector<6x16xf32>
    tpu.vector_store %arg5[%c0_19, %c202], %18 {strides = array<i32>} : memref<6x440xf32, #tpu.memory_space<vmem>>, vector<6x16xf32>,
    %c0_20 = arith.constant 0 : index
    %c144 = arith.constant 144 : index
    %20 = vector.load %arg1[%c0_20, %c144] : memref<6x256xf32, #tpu.memory_space<vmem>>, vector<6x16xf32>
    %c0_21 = arith.constant 0 : index
    %c222 = arith.constant 222 : index
    %21 = vector.load %arg5[%c0_21, %c222] : memref<6x440xf32, #tpu.memory_space<vmem>>, vector<6x16xf32>
    tpu.vector_store %arg5[%c0_21, %c222], %20 {strides = array<i32>} : memref<6x440xf32, #tpu.memory_space<vmem>>, vector<6x16xf32>,
    %c0_22 = arith.constant 0 : index
    %c160 = arith.constant 160 : index
    %22 = vector.load %arg1[%c0_22, %c160] : memref<6x256xf32, #tpu.memory_space<vmem>>, vector<6x16xf32>
    %c0_23 = arith.constant 0 : index
    %c242 = arith.constant 242 : index
    %23 = vector.load %arg5[%c0_23, %c242] : memref<6x440xf32, #tpu.memory_space<vmem>>, vector<6x16xf32>
    tpu.vector_store %arg5[%c0_23, %c242], %22 {strides = array<i32>} : memref<6x440xf32, #tpu.memory_space<vmem>>, vector<6x16xf32>,
    %c0_24 = arith.constant 0 : index
    %c176 = arith.constant 176 : index
    %24 = vector.load %arg1[%c0_24, %c176] : memref<6x256xf32, #tpu.memory_space<vmem>>, vector<6x16xf32>
    %c0_25 = arith.constant 0 : index
    %c262 = arith.constant 262 : index
    %25 = vector.load %arg5[%c0_25, %c262] : memref<6x440xf32, #tpu.memory_space<vmem>>, vector<6x16xf32>
    tpu.vector_store %arg5[%c0_25, %c262], %24 {strides = array<i32>} : memref<6x440xf32, #tpu.memory_space<vmem>>, vector<6x16xf32>,
    %c0_26 = arith.constant 0 : index
    %c192 = arith.constant 192 : index
    %26 = vector.load %arg1[%c0_26, %c192] : memref<6x256xf32, #tpu.memory_space<vmem>>, vector<6x16xf32>
    %c0_27 = arith.constant 0 : index
    %c282 = arith.constant 282 : index
    %27 = vector.load %arg5[%c0_27, %c282] : memref<6x440xf32, #tpu.memory_space<vmem>>, vector<6x16xf32>
    tpu.vector_store %arg5[%c0_27, %c282], %26 {strides = array<i32>} : memref<6x440xf32, #tpu.memory_space<vmem>>, vector<6x16xf32>,
    %c0_28 = arith.constant 0 : index
    %c208 = arith.constant 208 : index
    %28 = vector.load %arg1[%c0_28, %c208] : memref<6x256xf32, #tpu.memory_space<vmem>>, vector<6x16xf32>
    %c0_29 = arith.constant 0 : index
    %c302 = arith.constant 302 : index
    %29 = vector.load %arg5[%c0_29, %c302] : memref<6x440xf32, #tpu.memory_space<vmem>>, vector<6x16xf32>
    tpu.vector_store %arg5[%c0_29, %c302], %28 {strides = array<i32>} : memref<6x440xf32, #tpu.memory_space<vmem>>, vector<6x16xf32>,
    %c0_30 = arith.constant 0 : index
    %c224 = arith.constant 224 : index
    %30 = vector.load %arg1[%c0_30, %c224] : memref<6x256xf32, #tpu.memory_space<vmem>>, vector<6x16xf32>
    %c0_31 = arith.constant 0 : index
    %c322 = arith.constant 322 : index
    %31 = vector.load %arg5[%c0_31, %c322] : memref<6x440xf32, #tpu.memory_space<vmem>>, vector<6x16xf32>
    tpu.vector_store %arg5[%c0_31, %c322], %30 {strides = array<i32>} : memref<6x440xf32, #tpu.memory_space<vmem>>, vector<6x16xf32>,
    %c0_32 = arith.constant 0 : index
    %c240 = arith.constant 240 : index
    %32 = vector.load %arg1[%c0_32, %c240] : memref<6x256xf32, #tpu.memory_space<vmem>>, vector<6x16xf32>
    %c0_33 = arith.constant 0 : index
    %c342 = arith.constant 342 : index
    %33 = vector.load %arg5[%c0_33, %c342] : memref<6x440xf32, #tpu.memory_space<vmem>>, vector<6x16xf32>
    tpu.vector_store %arg5[%c0_33, %c342], %32 {strides = array<i32>} : memref<6x440xf32, #tpu.memory_space<vmem>>, vector<6x16xf32>,
    %c0_34 = arith.constant 0 : index
    %c0_35 = arith.constant 0 : index
    %34 = vector.load %arg5[%c0_34, %c0_35] : memref<6x440xf32, #tpu.memory_space<vmem>>, vector<3x384xf32>
    %c0_36 = arith.constant 0 : index
    %c0_37 = arith.constant 0 : index
    %35 = vector.load %arg6[%c0_36, %c0_37] : memref<27x768xf32, #tpu.memory_space<vmem>>, vector<3x384xf32>
    tpu.vector_store %arg6[%c0_36, %c0_37], %34 {strides = array<i32>} : memref<27x768xf32, #tpu.memory_space<vmem>>, vector<3x384xf32>,
    %c3 = arith.constant 3 : index
    %c0_38 = arith.constant 0 : index
    %36 = vector.load %arg5[%c3, %c0_38] : memref<6x440xf32, #tpu.memory_space<vmem>>, vector<3x384xf32>
    %c0_39 = arith.constant 0 : index
    %c384 = arith.constant 384 : index
    %37 = vector.load %arg6[%c0_39, %c384] : memref<27x768xf32, #tpu.memory_space<vmem>>, vector<3x384xf32>
    tpu.vector_store %arg6[%c0_39, %c384], %36 {strides = array<i32>} : memref<27x768xf32, #tpu.memory_space<vmem>>, vector<3x384xf32>,
    %c0_40 = arith.constant 0 : index
    %c1 = arith.constant 1 : index
    %38 = vector.load %arg5[%c0_40, %c1] : memref<6x440xf32, #tpu.memory_space<vmem>>, vector<3x384xf32>
    %c3_41 = arith.constant 3 : index
    %c0_42 = arith.constant 0 : index
    %39 = vector.load %arg6[%c3_41, %c0_42] : memref<27x768xf32, #tpu.memory_space<vmem>>, vector<3x384xf32>
    tpu.vector_store %arg6[%c3_41, %c0_42], %38 {strides = array<i32>} : memref<27x768xf32, #tpu.memory_space<vmem>>, vector<3x384xf32>,
    %c3_43 = arith.constant 3 : index
    %c1_44 = arith.constant 1 : index
    %40 = vector.load %arg5[%c3_43, %c1_44] : memref<6x440xf32, #tpu.memory_space<vmem>>, vector<3x384xf32>
    %c3_45 = arith.constant 3 : index
    %c384_46 = arith.constant 384 : index
    %41 = vector.load %arg6[%c3_45, %c384_46] : memref<27x768xf32, #tpu.memory_space<vmem>>, vector<3x384xf32>
    tpu.vector_store %arg6[%c3_45, %c384_46], %40 {strides = array<i32>} : memref<27x768xf32, #tpu.memory_space<vmem>>, vector<3x384xf32>,
    %c0_47 = arith.constant 0 : index
    %c2 = arith.constant 2 : index
    %42 = vector.load %arg5[%c0_47, %c2] : memref<6x440xf32, #tpu.memory_space<vmem>>, vector<3x384xf32>
    %c6 = arith.constant 6 : index
    %c0_48 = arith.constant 0 : index
    %43 = vector.load %arg6[%c6, %c0_48] : memref<27x768xf32, #tpu.memory_space<vmem>>, vector<3x384xf32>
    tpu.vector_store %arg6[%c6, %c0_48], %42 {strides = array<i32>} : memref<27x768xf32, #tpu.memory_space<vmem>>, vector<3x384xf32>,
    %c3_49 = arith.constant 3 : index
    %c2_50 = arith.constant 2 : index
    %44 = vector.load %arg5[%c3_49, %c2_50] : memref<6x440xf32, #tpu.memory_space<vmem>>, vector<3x384xf32>
    %c6_51 = arith.constant 6 : index
    %c384_52 = arith.constant 384 : index
    %45 = vector.load %arg6[%c6_51, %c384_52] : memref<27x768xf32, #tpu.memory_space<vmem>>, vector<3x384xf32>
    tpu.vector_store %arg6[%c6_51, %c384_52], %44 {strides = array<i32>} : memref<27x768xf32, #tpu.memory_space<vmem>>, vector<3x384xf32>,
    %c0_53 = arith.constant 0 : index
    %c20 = arith.constant 20 : index
    %46 = vector.load %arg5[%c0_53, %c20] : memref<6x440xf32, #tpu.memory_space<vmem>>, vector<3x384xf32>
    %c9 = arith.constant 9 : index
    %c0_54 = arith.constant 0 : index
    %47 = vector.load %arg6[%c9, %c0_54] : memref<27x768xf32, #tpu.memory_space<vmem>>, vector<3x384xf32>
    tpu.vector_store %arg6[%c9, %c0_54], %46 {strides = array<i32>} : memref<27x768xf32, #tpu.memory_space<vmem>>, vector<3x384xf32>,
    %c3_55 = arith.constant 3 : index
    %c20_56 = arith.constant 20 : index
    %48 = vector.load %arg5[%c3_55, %c20_56] : memref<6x440xf32, #tpu.memory_space<vmem>>, vector<3x384xf32>
    %c9_57 = arith.constant 9 : index
    %c384_58 = arith.constant 384 : index
    %49 = vector.load %arg6[%c9_57, %c384_58] : memref<27x768xf32, #tpu.memory_space<vmem>>, vector<3x384xf32>
    tpu.vector_store %arg6[%c9_57, %c384_58], %48 {strides = array<i32>} : memref<27x768xf32, #tpu.memory_space<vmem>>, vector<3x384xf32>,
    %c0_59 = arith.constant 0 : index
    %c21 = arith.constant 21 : index
    %50 = vector.load %arg5[%c0_59, %c21] : memref<6x440xf32, #tpu.memory_space<vmem>>, vector<3x384xf32>
    %c12 = arith.constant 12 : index
    %c0_60 = arith.constant 0 : index
    %51 = vector.load %arg6[%c12, %c0_60] : memref<27x768xf32, #tpu.memory_space<vmem>>, vector<3x384xf32>
    tpu.vector_store %arg6[%c12, %c0_60], %50 {strides = array<i32>} : memref<27x768xf32, #tpu.memory_space<vmem>>, vector<3x384xf32>,
    %c3_61 = arith.constant 3 : index
    %c21_62 = arith.constant 21 : index
    %52 = vector.load %arg5[%c3_61, %c21_62] : memref<6x440xf32, #tpu.memory_space<vmem>>, vector<3x384xf32>
    %c12_63 = arith.constant 12 : index
    %c384_64 = arith.constant 384 : index
    %53 = vector.load %arg6[%c12_63, %c384_64] : memref<27x768xf32, #tpu.memory_space<vmem>>, vector<3x384xf32>
    tpu.vector_store %arg6[%c12_63, %c384_64], %52 {strides = array<i32>} : memref<27x768xf32, #tpu.memory_space<vmem>>, vector<3x384xf32>,
    %c0_65 = arith.constant 0 : index
    %c22 = arith.constant 22 : index
    %54 = vector.load %arg5[%c0_65, %c22] : memref<6x440xf32, #tpu.memory_space<vmem>>, vector<3x384xf32>
    %c15 = arith.constant 15 : index
    %c0_66 = arith.constant 0 : index
    %55 = vector.load %arg6[%c15, %c0_66] : memref<27x768xf32, #tpu.memory_space<vmem>>, vector<3x384xf32>
    tpu.vector_store %arg6[%c15, %c0_66], %54 {strides = array<i32>} : memref<27x768xf32, #tpu.memory_space<vmem>>, vector<3x384xf32>,
    %c3_67 = arith.constant 3 : index
    %c22_68 = arith.constant 22 : index
    %56 = vector.load %arg5[%c3_67, %c22_68] : memref<6x440xf32, #tpu.memory_space<vmem>>, vector<3x384xf32>
    %c15_69 = arith.constant 15 : index
    %c384_70 = arith.constant 384 : index
    %57 = vector.load %arg6[%c15_69, %c384_70] : memref<27x768xf32, #tpu.memory_space<vmem>>, vector<3x384xf32>
    tpu.vector_store %arg6[%c15_69, %c384_70], %56 {strides = array<i32>} : memref<27x768xf32, #tpu.memory_space<vmem>>, vector<3x384xf32>,
    %c0_71 = arith.constant 0 : index
    %c40 = arith.constant 40 : index
    %58 = vector.load %arg5[%c0_71, %c40] : memref<6x440xf32, #tpu.memory_space<vmem>>, vector<3x384xf32>
    %c18 = arith.constant 18 : index
    %c0_72 = arith.constant 0 : index
    %59 = vector.load %arg6[%c18, %c0_72] : memref<27x768xf32, #tpu.memory_space<vmem>>, vector<3x384xf32>
    tpu.vector_store %arg6[%c18, %c0_72], %58 {strides = array<i32>} : memref<27x768xf32, #tpu.memory_space<vmem>>, vector<3x384xf32>,
    %c3_73 = arith.constant 3 : index
    %c40_74 = arith.constant 40 : index
    %60 = vector.load %arg5[%c3_73, %c40_74] : memref<6x440xf32, #tpu.memory_space<vmem>>, vector<3x384xf32>
    %c18_75 = arith.constant 18 : index
    %c384_76 = arith.constant 384 : index
    %61 = vector.load %arg6[%c18_75, %c384_76] : memref<27x768xf32, #tpu.memory_space<vmem>>, vector<3x384xf32>
    tpu.vector_store %arg6[%c18_75, %c384_76], %60 {strides = array<i32>} : memref<27x768xf32, #tpu.memory_space<vmem>>, vector<3x384xf32>,
    %c0_77 = arith.constant 0 : index
    %c41 = arith.constant 41 : index
    %62 = vector.load %arg5[%c0_77, %c41] : memref<6x440xf32, #tpu.memory_space<vmem>>, vector<3x384xf32>
    %c21_78 = arith.constant 21 : index
    %c0_79 = arith.constant 0 : index
    %63 = vector.load %arg6[%c21_78, %c0_79] : memref<27x768xf32, #tpu.memory_space<vmem>>, vector<3x384xf32>
    tpu.vector_store %arg6[%c21_78, %c0_79], %62 {strides = array<i32>} : memref<27x768xf32, #tpu.memory_space<vmem>>, vector<3x384xf32>,
    %c3_80 = arith.constant 3 : index
    %c41_81 = arith.constant 41 : index
    %64 = vector.load %arg5[%c3_80, %c41_81] : memref<6x440xf32, #tpu.memory_space<vmem>>, vector<3x384xf32>
    %c21_82 = arith.constant 21 : index
    %c384_83 = arith.constant 384 : index
    %65 = vector.load %arg6[%c21_82, %c384_83] : memref<27x768xf32, #tpu.memory_space<vmem>>, vector<3x384xf32>
    tpu.vector_store %arg6[%c21_82, %c384_83], %64 {strides = array<i32>} : memref<27x768xf32, #tpu.memory_space<vmem>>, vector<3x384xf32>,
    %c0_84 = arith.constant 0 : index
    %c42_85 = arith.constant 42 : index
    %66 = vector.load %arg5[%c0_84, %c42_85] : memref<6x440xf32, #tpu.memory_space<vmem>>, vector<3x384xf32>
    %c24 = arith.constant 24 : index
    %c0_86 = arith.constant 0 : index
    %67 = vector.load %arg6[%c24, %c0_86] : memref<27x768xf32, #tpu.memory_space<vmem>>, vector<3x384xf32>
    tpu.vector_store %arg6[%c24, %c0_86], %66 {strides = array<i32>} : memref<27x768xf32, #tpu.memory_space<vmem>>, vector<3x384xf32>,
    %c3_87 = arith.constant 3 : index
    %c42_88 = arith.constant 42 : index
    %68 = vector.load %arg5[%c3_87, %c42_88] : memref<6x440xf32, #tpu.memory_space<vmem>>, vector<3x384xf32>
    %c24_89 = arith.constant 24 : index
    %c384_90 = arith.constant 384 : index
    %69 = vector.load %arg6[%c24_89, %c384_90] : memref<27x768xf32, #tpu.memory_space<vmem>>, vector<3x384xf32>
    tpu.vector_store %arg6[%c24_89, %c384_90], %68 {strides = array<i32>} : memref<27x768xf32, #tpu.memory_space<vmem>>, vector<3x384xf32>,
    %c0_91 = arith.constant 0 : index
    %c0_92 = arith.constant 0 : index
    %70 = vector.load %arg2[%c0_91, %c0_92] : memref<6x27xf32, #tpu.memory_space<vmem>>, vector<6x27xf32>
    %c0_93 = arith.constant 0 : index
    %c0_94 = arith.constant 0 : index
    %71 = vector.load %arg6[%c0_93, %c0_94] : memref<27x768xf32, #tpu.memory_space<vmem>>, vector<27x768xf32>
    %cst_95 = arith.constant dense<0.000000e+00> : vector<6x768xf32>
    %72 = tpu.matmul %70, %71, %cst_95 {dimension_numbers = #tpu.dot_dimension_numbers<[1], [0], [0], [1], [0, 0, 1, 1], [], []>} : vector<6x27xf32>, vector<27x768xf32>, vector<6x768xf32> -> vector<6x768xf32>
    %73 = vector.extract_strided_slice %72 {offsets = [0, 0], sizes = [6, 384], strides = [1, 1]} : vector<6x768xf32> to vector<6x384xf32>
    %c0_96 = arith.constant 0 : index
    %c0_97 = arith.constant 0 : index
    %74 = vector.load %arg3[%c0_96, %c0_97] : memref<6x1xf32, #tpu.memory_space<vmem>>, vector<6x1xf32>
    %75 = vector.broadcast %74 : vector<6x1xf32> to vector<6x384xf32>
    %76 = arith.addf %73, %75 : vector<6x384xf32>
    %c0_98 = arith.constant 0 : index
    %c0_99 = arith.constant 0 : index
    %c0_100 = arith.constant 0 : index
    %77 = vector.load %arg4[%c0_98, %c0_99, %c0_100] : memref<2x6x384xf32, #tpu.memory_space<vmem>>, vector<1x6x384xf32>
    %78 = vector.shape_cast %77 : vector<1x6x384xf32> to vector<6x384xf32>
    %79 = vector.shape_cast %76 : vector<6x384xf32> to vector<1x6x384xf32>
    tpu.vector_store %arg4[%c0_98, %c0_99, %c0_100], %79 {strides = array<i32>} : memref<2x6x384xf32, #tpu.memory_space<vmem>>, vector<1x6x384xf32>,
    %80 = vector.extract_strided_slice %72 {offsets = [0, 384], sizes = [6, 384], strides = [1, 1]} : vector<6x768xf32> to vector<6x384xf32>
    %c0_101 = arith.constant 0 : index
    %c0_102 = arith.constant 0 : index
    %81 = vector.load %arg3[%c0_101, %c0_102] : memref<6x1xf32, #tpu.memory_space<vmem>>, vector<6x1xf32>
    %82 = vector.broadcast %81 : vector<6x1xf32> to vector<6x384xf32>
    %83 = arith.addf %80, %82 : vector<6x384xf32>
    %c1_103 = arith.constant 1 : index
    %c0_104 = arith.constant 0 : index
    %c0_105 = arith.constant 0 : index
    %84 = vector.load %arg4[%c1_103, %c0_104, %c0_105] : memref<2x6x384xf32, #tpu.memory_space<vmem>>, vector<1x6x384xf32>
    %85 = vector.shape_cast %84 : vector<1x6x384xf32> to vector<6x384xf32>
    %86 = vector.shape_cast %83 : vector<6x384xf32> to vector<1x6x384xf32>
    tpu.vector_store %arg4[%c1_103, %c0_104, %c0_105], %86 {strides = array<i32>} : memref<2x6x384xf32, #tpu.memory_space<vmem>>, vector<1x6x384xf32>,
    return
  }
  func.func @transform_0(%arg0: i32) -> (i32, i32) {
    %c0_i32 = arith.constant 0 : i32
    %c0_i32_0 = arith.constant 0 : i32
    %c0_i32_1 = arith.constant 0 : i32
    return %c0_i32, %c0_i32_0 : i32, i32
  }
  func.func @transform_1(%arg0: i32) -> (i32, i32) {
    %c0_i32 = arith.constant 0 : i32
    %c0_i32_0 = arith.constant 0 : i32
    %c0_i32_1 = arith.constant 0 : i32
    return %c0_i32, %c0_i32_0 : i32, i32
  }
  func.func @transform_2(%arg0: i32) -> (i32, i32) {
    %c0_i32 = arith.constant 0 : i32
    %c0_i32_0 = arith.constant 0 : i32
    %c0_i32_1 = arith.constant 0 : i32
    return %c0_i32, %c0_i32_0 : i32, i32
  }
  func.func @transform_3(%arg0: i32) -> (i32, i32, i32) {
    %c0_i32 = arith.constant 0 : i32
    %c0_i32_0 = arith.constant 0 : i32
    %c0_i32_1 = arith.constant 0 : i32
    %c0_i32_2 = arith.constant 0 : i32
    return %c0_i32, %c0_i32_0, %c0_i32_1 : i32, i32, i32
  }
}

</mosaic_0001>

<llo_original>
// kernel: conv_transpose2d.1
$region0: #{conv_transpose2d.1}
  #allocation0 [shape = 'u32[]', space=smem, size = 0x4, offset = 0x4, fixed_abs, tag = 'smem constant byte address 0x4 - core index']
  #allocation1 [shape = 'u32[144,128]{1,0:T(1,128)}', space=vmem, size = 0x12000, scoped, tag = 'internal scratch']
  #allocation2 [shape = 'f32[6,440]{1,0:T(8,128)}', space=vmem, size = 0x4000, scoped, tag = 'scratch operand']
  #allocation3 [shape = 'f32[27,768]{1,0:T(8,128)}', space=vmem, size = 0x18000, scoped, tag = 'scratch operand']
  %s0 = inlined_call_operand.vmem [shape: f32[6,256], index: 0, kind: input, shape index: {}]
  %s1 = inlined_call_operand.vmem [shape: f32[6,27], index: 1, kind: input, shape index: {}]
  %s2 = inlined_call_operand.vmem [shape: f32[6,1], index: 2, kind: input, shape index: {}]
  %s3 = inlined_call_operand.vmem [shape: f32[2,6,384], index: 3, kind: output, shape index: {}]
  %s4 = sld [smem:[#allocation0]]
  $region22: #{conv_transpose2d.1} parent=0
    _
  %s6 = ssub.s32 1, %s4
  %s7 = scalar_select 0, %s6, %s4
  // Predicated region
  $region2: #{conv_transpose2d.1} parent=0 // pred_check
    _
  $region3: #{conv_transpose2d.1} parent=0 // pred_check_branch
    %9 = sbr.rel (0) target = $region5
  $region4: #{conv_transpose2d.1} parent=0 // pred_region
    _
  $region5: #{conv_transpose2d.1} parent=0 // pred_fallthru
    _
  // Predicated region
  $region6: #{conv_transpose2d.1} parent=0 // pred_check
    _
  $region7: #{conv_transpose2d.1} parent=0 // pred_check_branch
    %11 = sbr.rel (0) target = $region9
  $region8: #{conv_transpose2d.1} parent=0 // pred_region
    _
  $region9: #{conv_transpose2d.1} parent=0 // pred_fallthru
    _
  // Predicated region
  $region10: #{conv_transpose2d.1} parent=0 // pred_check
    _
  $region11: #{conv_transpose2d.1} parent=0 // pred_check_branch
    %13 = sbr.rel (0) target = $region13
  $region12: #{conv_transpose2d.1} parent=0 // pred_region
    _
  $region13: #{conv_transpose2d.1} parent=0 // pred_fallthru
    _
  %14 = vst [vmem:[#allocation2] sm:$0x3f] 0.0
  %15 = vst [vmem:[#allocation2 + $0x8] sm:$0x3f] 0.0
  %16 = vst [vmem:[#allocation2 + $0x10] sm:$0x3f] 0.0
  %vm17 = vcmask 455680
  %18 = vst.msk [vmem:[#allocation2 + $0x18] sm:$0x3f] %vm17, 0.0
  %v19 = vld [vmem:[%s0] sm:$0x3f]
  %21 = vrot.lane.b32.xlu0 %v19, 42
  %v22 = vpop.permute.xlu0 %21
  %vm24 = vcmask 472400
  %25 = vst.msk [vmem:[#allocation2] sm:$0x3f] %vm24, %v22
  %v26 = vld [vmem:[%s0] sm:$0x3f]
  %28 = vrot.lane.b32.xlu0 %v26, 46
  %v29 = vpop.permute.xlu0 %28
  %vm31 = vcmask 636400
  %32 = vst.msk [vmem:[#allocation2] sm:$0x3f] %vm31, %v29
  %v33 = vld [vmem:[%s0] sm:$0x3f]
  %35 = vrot.lane.b32.xlu0 %v33, 50
  %v36 = vpop.permute.xlu0 %35
  %vm38 = vcmask 800400
  %39 = vst.msk [vmem:[#allocation2] sm:$0x3f] %vm38, %v36
  %v40 = vld [vmem:[%s0] sm:$0x3f]
  %42 = vrot.lane.b32.xlu0 %v40, 54
  %v43 = vpop.permute.xlu0 %42
  %vm45 = vcmask 964400
  %46 = vst.msk [vmem:[#allocation2] sm:$0x3f] %vm45, %v43
  %v47 = vld [vmem:[%s0] sm:$0x3f]
  %49 = vrot.lane.b32.xlu0 %v47, 58
  %v50 = vpop.permute.xlu0 %49
  %vm52 = vcmask 1046480
  %53 = vst.msk [vmem:[#allocation2] sm:$0x3f] %vm52, %v50
  %vm54 = vcmask 78848
  %55 = vst.msk [vmem:[#allocation2 + $0x8] sm:$0x3f] %vm54, %v50
  %v56 = vld [vmem:[%s0] sm:$0x3f]
  %58 = vrot.lane.b32.xlu0 %v56, 62
  %v59 = vpop.permute.xlu0 %58
  %vm61 = vcmask 242800
  %62 = vst.msk [vmem:[#allocation2 + $0x8] sm:$0x3f] %vm61, %v59
  %v63 = vld [vmem:[%s0] sm:$0x3f]
  %65 = vrot.lane.b32.xlu0 %v63, 66
  %v66 = vpop.permute.xlu0 %65
  %vm68 = vcmask 406800
  %69 = vst.msk [vmem:[#allocation2 + $0x8] sm:$0x3f] %vm68, %v66
  %v70 = vld [vmem:[%s0] sm:$0x3f]
  %72 = vrot.lane.b32.xlu0 %v70, 70
  %v73 = vpop.permute.xlu0 %72
  %vm75 = vcmask 570800
  %76 = vst.msk [vmem:[#allocation2 + $0x8] sm:$0x3f] %vm75, %v73
  %v77 = vld [vmem:[%s0 + $0x8] sm:$0x3f]
  %79 = vrot.lane.b32.xlu0 %v77, 74
  %v80 = vpop.permute.xlu0 %79
  %vm82 = vcmask 734800
  %83 = vst.msk [vmem:[#allocation2 + $0x8] sm:$0x3f] %vm82, %v80
  %v84 = vld [vmem:[%s0 + $0x8] sm:$0x3f]
  %86 = vrot.lane.b32.xlu0 %v84, 78
  %v87 = vpop.permute.xlu0 %86
  %vm89 = vcmask 898800
  %90 = vst.msk [vmem:[#allocation2 + $0x8] sm:$0x3f] %vm89, %v87
  %v91 = vld [vmem:[%s0 + $0x8] sm:$0x3f]
  %93 = vrot.lane.b32.xlu0 %v91, 82
  %v94 = vpop.permute.xlu0 %93
  %vm96 = vcmask 1046416
  %97 = vst.msk [vmem:[#allocation2 + $0x8] sm:$0x3f] %vm96, %v94
  %vm98 = vcmask 13312
  %99 = vst.msk [vmem:[#allocation2 + $0x10] sm:$0x3f] %vm98, %v94
  %v100 = vld [vmem:[%s0 + $0x8] sm:$0x3f]
  %102 = vrot.lane.b32.xlu0 %v100, 86
  %v103 = vpop.permute.xlu0 %102
  %vm105 = vcmask 177200
  %106 = vst.msk [vmem:[#allocation2 + $0x10] sm:$0x3f] %vm105, %v103
  %v107 = vld [vmem:[%s0 + $0x8] sm:$0x3f]
  %109 = vrot.lane.b32.xlu0 %v107, 90
  %v110 = vpop.permute.xlu0 %109
  %vm112 = vcmask 341200
  %113 = vst.msk [vmem:[#allocation2 + $0x10] sm:$0x3f] %vm112, %v110
  %v114 = vld [vmem:[%s0 + $0x8] sm:$0x3f]
  %116 = vrot.lane.b32.xlu0 %v114, 94
  %v117 = vpop.permute.xlu0 %116
  %vm119 = vcmask 505200
  %120 = vst.msk [vmem:[#allocation2 + $0x10] sm:$0x3f] %vm119, %v117
  %v121 = vld [vmem:[%s0 + $0x8] sm:$0x3f]
  %123 = vrot.lane.b32.xlu0 %v121, 98
  %v124 = vpop.permute.xlu0 %123
  %vm126 = vcmask 669200
  %127 = vst.msk [vmem:[#allocation2 + $0x10] sm:$0x3f] %vm126, %v124
  %v128 = vld [vmem:[%s0 + $0x8] sm:$0x3f]
  %130 = vrot.lane.b32.xlu0 %v128, 102
  %v131 = vpop.permute.xlu0 %130
  %vm133 = vcmask 833200
  %134 = vst.msk [vmem:[#allocation2 + $0x10] sm:$0x3f] %vm133, %v131
  %v135 = vld [vmem:[#allocation2] sm:$0x7]
  %v136 = vld [vmem:[#allocation2 + $0x8] sm:$0x7]
  %v137 = vld [vmem:[#allocation2 + $0x10] sm:$0x7]
  %138 = vst [vmem:[#allocation3] sm:$0x7] %v135
  %139 = vst [vmem:[#allocation3 + $0x8] sm:$0x7] %v136
  %140 = vst [vmem:[#allocation3 + $0x10] sm:$0x7] %v137
  %v141 = vld [vmem:[#allocation2] sm:$0x38]
  %v142 = vld [vmem:[#allocation2 + $0x8] sm:$0x38]
  %v143 = vld [vmem:[#allocation2 + $0x10] sm:$0x38]
  %v147 = vrot.slane %v141, 3
  %v148 = vrot.slane %v142, 3
  %v149 = vrot.slane %v143, 3
  %153 = vst [vmem:[#allocation3 + $0x18] sm:$0x7] %v147
  %154 = vst [vmem:[#allocation3 + $0x20] sm:$0x7] %v148
  %155 = vst [vmem:[#allocation3 + $0x28] sm:$0x7] %v149
  %v156 = vld [vmem:[#allocation2] sm:$0x7]
  %v157 = vld [vmem:[#allocation2 + $0x8] sm:$0x7]
  %v158 = vld [vmem:[#allocation2 + $0x10] sm:$0x7]
  %v159 = vld [vmem:[#allocation2 + $0x18] sm:$0x7]
  %v164 = vrot.slane %v156, 5
  %v165 = vrot.slane %v157, 5
  %v166 = vrot.slane %v158, 5
  %v167 = vrot.slane %v159, 5
  %168 = vrot.lane.b32.xlu0 %v164, 127
  %v169 = vpop.permute.xlu0 %168
  %170 = vrot.lane.b32.xlu0 %v165, 127
  %v171 = vpop.permute.xlu0 %170
  %172 = vrot.lane.b32.xlu0 %v166, 127
  %v173 = vpop.permute.xlu0 %172
  %174 = vrot.lane.b32.xlu0 %v167, 127
  %v175 = vpop.permute.xlu0 %174
  %vm176 = vcmask 1039360
  %v177 = vsel %vm176, %v169, %v171
  %v178 = vsel %vm176, %v171, %v173
  %v179 = vsel %vm176, %v173, %v175
  %183 = vst [vmem:[#allocation3] sm:$0x38] %v177
  %184 = vst [vmem:[#allocation3 + $0x8] sm:$0x38] %v178
  %185 = vst [vmem:[#allocation3 + $0x10] sm:$0x38] %v179
  %v186 = vld [vmem:[#allocation2] sm:$0x38]
  %v187 = vld [vmem:[#allocation2 + $0x8] sm:$0x38]
  %v188 = vld [vmem:[#allocation2 + $0x10] sm:$0x38]
  %v189 = vld [vmem:[#allocation2 + $0x18] sm:$0x38]
  %194 = vrot.lane.b32.xlu0 %v186, 127
  %v195 = vpop.permute.xlu0 %194
  %196 = vrot.lane.b32.xlu0 %v187, 127
  %v197 = vpop.permute.xlu0 %196
  %198 = vrot.lane.b32.xlu0 %v188, 127
  %v199 = vpop.permute.xlu0 %198
  %200 = vrot.lane.b32.xlu0 %v189, 127
  %v201 = vpop.permute.xlu0 %200
  %v202 = vsel %vm176, %v195, %v197
  %v203 = vsel %vm176, %v197, %v199
  %v204 = vsel %vm176, %v199, %v201
  %208 = vst [vmem:[#allocation3 + $0x18] sm:$0x38] %v202
  %209 = vst [vmem:[#allocation3 + $0x20] sm:$0x38] %v203
  %210 = vst [vmem:[#allocation3 + $0x28] sm:$0x38] %v204
  %v211 = vld [vmem:[#allocation2] sm:$0x7]
  %v212 = vld [vmem:[#allocation2 + $0x8] sm:$0x7]
  %v213 = vld [vmem:[#allocation2 + $0x10] sm:$0x7]
  %v214 = vld [vmem:[#allocation2 + $0x18] sm:$0x7]
  %v219 = vrot.slane %v211, 2
  %v220 = vrot.slane %v212, 2
  %v221 = vrot.slane %v213, 2
  %v222 = vrot.slane %v214, 2
  %223 = vrot.lane.b32.xlu0 %v219, 126
  %v224 = vpop.permute.xlu0 %223
  %225 = vrot.lane.b32.xlu0 %v220, 126
  %v226 = vpop.permute.xlu0 %225
  %227 = vrot.lane.b32.xlu0 %v221, 126
  %v228 = vpop.permute.xlu0 %227
  %229 = vrot.lane.b32.xlu0 %v222, 126
  %v230 = vpop.permute.xlu0 %229
  %vm231 = vcmask 1031168
  %v232 = vsel %vm231, %v224, %v226
  %v233 = vsel %vm231, %v226, %v228
  %v234 = vsel %vm231, %v228, %v230
  %238 = vst [vmem:[#allocation3] sm:$0xc0] %v232
  %239 = vst [vmem:[#allocation3 + $0x8] sm:$0xc0] %v233
  %240 = vst [vmem:[#allocation3 + $0x10] sm:$0xc0] %v234
  %241 = vst [vmem:[#allocation3 + $0x30] sm:$0x1] %v232
  %242 = vst [vmem:[#allocation3 + $0x38] sm:$0x1] %v233
  %243 = vst [vmem:[#allocation3 + $0x40] sm:$0x1] %v234
  %v244 = vld [vmem:[#allocation2] sm:$0x38]
  %v245 = vld [vmem:[#allocation2 + $0x8] sm:$0x38]
  %v246 = vld [vmem:[#allocation2 + $0x10] sm:$0x38]
  %v247 = vld [vmem:[#allocation2 + $0x18] sm:$0x38]
  %v252 = vrot.slane %v244, 5
  %v253 = vrot.slane %v245, 5
  %v254 = vrot.slane %v246, 5
  %v255 = vrot.slane %v247, 5
  %256 = vrot.lane.b32.xlu0 %v252, 126
  %v257 = vpop.permute.xlu0 %256
  %258 = vrot.lane.b32.xlu0 %v253, 126
  %v259 = vpop.permute.xlu0 %258
  %260 = vrot.lane.b32.xlu0 %v254, 126
  %v261 = vpop.permute.xlu0 %260
  %262 = vrot.lane.b32.xlu0 %v255, 126
  %v263 = vpop.permute.xlu0 %262
  %v264 = vsel %vm231, %v257, %v259
  %v265 = vsel %vm231, %v259, %v261
  %v266 = vsel %vm231, %v261, %v263
  %270 = vst [vmem:[#allocation3 + $0x18] sm:$0xc0] %v264
  %271 = vst [vmem:[#allocation3 + $0x20] sm:$0xc0] %v265
  %272 = vst [vmem:[#allocation3 + $0x28] sm:$0xc0] %v266
  %273 = vst [vmem:[#allocation3 + $0x48] sm:$0x1] %v264
  %274 = vst [vmem:[#allocation3 + $0x50] sm:$0x1] %v265
  %275 = vst [vmem:[#allocation3 + $0x58] sm:$0x1] %v266
  %v276 = vld [vmem:[#allocation2] sm:$0x7]
  %v277 = vld [vmem:[#allocation2 + $0x8] sm:$0x7]
  %v278 = vld [vmem:[#allocation2 + $0x10] sm:$0x7]
  %v279 = vld [vmem:[#allocation2 + $0x18] sm:$0x7]
  %v284 = vrot.slane %v276, 7
  %v285 = vrot.slane %v277, 7
  %v286 = vrot.slane %v278, 7
  %v287 = vrot.slane %v279, 7
  %288 = vrot.lane.b32.xlu0 %v284, 108
  %v289 = vpop.permute.xlu0 %288
  %290 = vrot.lane.b32.xlu0 %v285, 108
  %v291 = vpop.permute.xlu0 %290
  %292 = vrot.lane.b32.xlu0 %v286, 108
  %v293 = vpop.permute.xlu0 %292
  %294 = vrot.lane.b32.xlu0 %v287, 108
  %v295 = vpop.permute.xlu0 %294
  %vm296 = vcmask 883712
  %v297 = vsel %vm296, %v289, %v291
  %v298 = vsel %vm296, %v291, %v293
  %v299 = vsel %vm296, %v293, %v295
  %303 = vst [vmem:[#allocation3 + $0x30] sm:$0xe] %v297
  %304 = vst [vmem:[#allocation3 + $0x38] sm:$0xe] %v298
  %305 = vst [vmem:[#allocation3 + $0x40] sm:$0xe] %v299
  %v306 = vld [vmem:[#allocation2] sm:$0x38]
  %v307 = vld [vmem:[#allocation2 + $0x8] sm:$0x38]
  %v308 = vld [vmem:[#allocation2 + $0x10] sm:$0x38]
  %v309 = vld [vmem:[#allocation2 + $0x18] sm:$0x38]
  %v314 = vrot.slane %v306, 2
  %v315 = vrot.slane %v307, 2
  %v316 = vrot.slane %v308, 2
  %v317 = vrot.slane %v309, 2
  %318 = vrot.lane.b32.xlu0 %v314, 108
  %v319 = vpop.permute.xlu0 %318
  %320 = vrot.lane.b32.xlu0 %v315, 108
  %v321 = vpop.permute.xlu0 %320
  %322 = vrot.lane.b32.xlu0 %v316, 108
  %v323 = vpop.permute.xlu0 %322
  %324 = vrot.lane.b32.xlu0 %v317, 108
  %v325 = vpop.permute.xlu0 %324
  %v326 = vsel %vm296, %v319, %v321
  %v327 = vsel %vm296, %v321, %v323
  %v328 = vsel %vm296, %v323, %v325
  %332 = vst [vmem:[#allocation3 + $0x48] sm:$0xe] %v326
  %333 = vst [vmem:[#allocation3 + $0x50] sm:$0xe] %v327
  %334 = vst [vmem:[#allocation3 + $0x58] sm:$0xe] %v328
  %v335 = vld [vmem:[#allocation2] sm:$0x7]
  %v336 = vld [vmem:[#allocation2 + $0x8] sm:$0x7]
  %v337 = vld [vmem:[#allocation2 + $0x10] sm:$0x7]
  %v338 = vld [vmem:[#allocation2 + $0x18] sm:$0x7]
  %v343 = vrot.slane %v335, 4
  %v344 = vrot.slane %v336, 4
  %v345 = vrot.slane %v337, 4
  %v346 = vrot.slane %v338, 4
  %347 = vrot.lane.b32.xlu0 %v343, 107
  %v348 = vpop.permute.xlu0 %347
  %349 = vrot.lane.b32.xlu0 %v344, 107
  %v350 = vpop.permute.xlu0 %349
  %351 = vrot.lane.b32.xlu0 %v345, 107
  %v352 = vpop.permute.xlu0 %351
  %353 = vrot.lane.b32.xlu0 %v346, 107
  %v354 = vpop.permute.xlu0 %353
  %vm355 = vcmask 875520
  %v356 = vsel %vm355, %v348, %v350
  %v357 = vsel %vm355, %v350, %v352
  %v358 = vsel %vm355, %v352, %v354
  %362 = vst [vmem:[#allocation3 + $0x30] sm:$0x70] %v356
  %363 = vst [vmem:[#allocation3 + $0x38] sm:$0x70] %v357
  %364 = vst [vmem:[#allocation3 + $0x40] sm:$0x70] %v358
  %v365 = vld [vmem:[#allocation2] sm:$0x38]
  %v366 = vld [vmem:[#allocation2 + $0x8] sm:$0x38]
  %v367 = vld [vmem:[#allocation2 + $0x10] sm:$0x38]
  %v368 = vld [vmem:[#allocation2 + $0x18] sm:$0x38]
  %v373 = vrot.slane %v365, 7
  %v374 = vrot.slane %v366, 7
  %v375 = vrot.slane %v367, 7
  %v376 = vrot.slane %v368, 7
  %377 = vrot.lane.b32.xlu0 %v373, 107
  %v378 = vpop.permute.xlu0 %377
  %379 = vrot.lane.b32.xlu0 %v374, 107
  %v380 = vpop.permute.xlu0 %379
  %381 = vrot.lane.b32.xlu0 %v375, 107
  %v382 = vpop.permute.xlu0 %381
  %383 = vrot.lane.b32.xlu0 %v376, 107
  %v384 = vpop.permute.xlu0 %383
  %v385 = vsel %vm355, %v378, %v380
  %v386 = vsel %vm355, %v380, %v382
  %v387 = vsel %vm355, %v382, %v384
  %391 = vst [vmem:[#allocation3 + $0x48] sm:$0x70] %v385
  %392 = vst [vmem:[#allocation3 + $0x50] sm:$0x70] %v386
  %393 = vst [vmem:[#allocation3 + $0x58] sm:$0x70] %v387
  %v394 = vld [vmem:[#allocation2] sm:$0x7]
  %v395 = vld [vmem:[#allocation2 + $0x8] sm:$0x7]
  %v396 = vld [vmem:[#allocation2 + $0x10] sm:$0x7]
  %v397 = vld [vmem:[#allocation2 + $0x18] sm:$0x7]
  %v402 = vrot.slane %v394, 1
  %v403 = vrot.slane %v395, 1
  %v404 = vrot.slane %v396, 1
  %v405 = vrot.slane %v397, 1
  %406 = vrot.lane.b32.xlu0 %v402, 106
  %v407 = vpop.permute.xlu0 %406
  %408 = vrot.lane.b32.xlu0 %v403, 106
  %v409 = vpop.permute.xlu0 %408
  %410 = vrot.lane.b32.xlu0 %v404, 106
  %v411 = vpop.permute.xlu0 %410
  %412 = vrot.lane.b32.xlu0 %v405, 106
  %v413 = vpop.permute.xlu0 %412
  %vm414 = vcmask 867328
  %v415 = vsel %vm414, %v407, %v409
  %v416 = vsel %vm414, %v409, %v411
  %v417 = vsel %vm414, %v411, %v413
  %421 = vst [vmem:[#allocation3 + $0x30] sm:$0x80] %v415
  %422 = vst [vmem:[#allocation3 + $0x38] sm:$0x80] %v416
  %423 = vst [vmem:[#allocation3 + $0x40] sm:$0x80] %v417
  %424 = vst [vmem:[#allocation3 + $0x60] sm:$0x3] %v415
  %425 = vst [vmem:[#allocation3 + $0x68] sm:$0x3] %v416
  %426 = vst [vmem:[#allocation3 + $0x70] sm:$0x3] %v417
  %v427 = vld [vmem:[#allocation2] sm:$0x38]
  %v428 = vld [vmem:[#allocation2 + $0x8] sm:$0x38]
  %v429 = vld [vmem:[#allocation2 + $0x10] sm:$0x38]
  %v430 = vld [vmem:[#allocation2 + $0x18] sm:$0x38]
  %v435 = vrot.slane %v427, 4
  %v436 = vrot.slane %v428, 4
  %v437 = vrot.slane %v429, 4
  %v438 = vrot.slane %v430, 4
  %439 = vrot.lane.b32.xlu0 %v435, 106
  %v440 = vpop.permute.xlu0 %439
  %441 = vrot.lane.b32.xlu0 %v436, 106
  %v442 = vpop.permute.xlu0 %441
  %443 = vrot.lane.b32.xlu0 %v437, 106
  %v444 = vpop.permute.xlu0 %443
  %445 = vrot.lane.b32.xlu0 %v438, 106
  %v446 = vpop.permute.xlu0 %445
  %v447 = vsel %vm414, %v440, %v442
  %v448 = vsel %vm414, %v442, %v444
  %v449 = vsel %vm414, %v444, %v446
  %453 = vst [vmem:[#allocation3 + $0x48] sm:$0x80] %v447
  %454 = vst [vmem:[#allocation3 + $0x50] sm:$0x80] %v448
  %455 = vst [vmem:[#allocation3 + $0x58] sm:$0x80] %v449
  %456 = vst [vmem:[#allocation3 + $0x78] sm:$0x3] %v447
  %457 = vst [vmem:[#allocation3 + $0x80] sm:$0x3] %v448
  %458 = vst [vmem:[#allocation3 + $0x88] sm:$0x3] %v449
  %v459 = vld [vmem:[#allocation2] sm:$0x7]
  %v460 = vld [vmem:[#allocation2 + $0x8] sm:$0x7]
  %v461 = vld [vmem:[#allocation2 + $0x10] sm:$0x7]
  %v462 = vld [vmem:[#allocation2 + $0x18] sm:$0x7]
  %v467 = vrot.slane %v459, 6
  %v468 = vrot.slane %v460, 6
  %v469 = vrot.slane %v461, 6
  %v470 = vrot.slane %v462, 6
  %471 = vrot.lane.b32.xlu0 %v467, 88
  %v472 = vpop.permute.xlu0 %471
  %473 = vrot.lane.b32.xlu0 %v468, 88
  %v474 = vpop.permute.xlu0 %473
  %475 = vrot.lane.b32.xlu0 %v469, 88
  %v476 = vpop.permute.xlu0 %475
  %477 = vrot.lane.b32.xlu0 %v470, 88
  %v478 = vpop.permute.xlu0 %477
  %vm479 = vcmask 719872
  %v480 = vsel %vm479, %v472, %v474
  %v481 = vsel %vm479, %v474, %v476
  %v482 = vsel %vm479, %v476, %v478
  %486 = vst [vmem:[#allocation3 + $0x60] sm:$0x1c] %v480
  %487 = vst [vmem:[#allocation3 + $0x68] sm:$0x1c] %v481
  %488 = vst [vmem:[#allocation3 + $0x70] sm:$0x1c] %v482
  %v489 = vld [vmem:[#allocation2] sm:$0x38]
  %v490 = vld [vmem:[#allocation2 + $0x8] sm:$0x38]
  %v491 = vld [vmem:[#allocation2 + $0x10] sm:$0x38]
  %v492 = vld [vmem:[#allocation2 + $0x18] sm:$0x38]
  %v497 = vrot.slane %v489, 1
  %v498 = vrot.slane %v490, 1
  %v499 = vrot.slane %v491, 1
  %v500 = vrot.slane %v492, 1
  %501 = vrot.lane.b32.xlu0 %v497, 88
  %v502 = vpop.permute.xlu0 %501
  %503 = vrot.lane.b32.xlu0 %v498, 88
  %v504 = vpop.permute.xlu0 %503
  %505 = vrot.lane.b32.xlu0 %v499, 88
  %v506 = vpop.permute.xlu0 %505
  %507 = vrot.lane.b32.xlu0 %v500, 88
  %v508 = vpop.permute.xlu0 %507
  %v509 = vsel %vm479, %v502, %v504
  %v510 = vsel %vm479, %v504, %v506
  %v511 = vsel %vm479, %v506, %v508
  %515 = vst [vmem:[#allocation3 + $0x78] sm:$0x1c] %v509
  %516 = vst [vmem:[#allocation3 + $0x80] sm:$0x1c] %v510
  %517 = vst [vmem:[#allocation3 + $0x88] sm:$0x1c] %v511
  %v518 = vld [vmem:[#allocation2] sm:$0x7]
  %v519 = vld [vmem:[#allocation2 + $0x8] sm:$0x7]
  %v520 = vld [vmem:[#allocation2 + $0x10] sm:$0x7]
  %v521 = vld [vmem:[#allocation2 + $0x18] sm:$0x7]
  %v526 = vrot.slane %v518, 3
  %v527 = vrot.slane %v519, 3
  %v528 = vrot.slane %v520, 3
  %v529 = vrot.slane %v521, 3
  %530 = vrot.lane.b32.xlu0 %v526, 87
  %v531 = vpop.permute.xlu0 %530
  %532 = vrot.lane.b32.xlu0 %v527, 87
  %v533 = vpop.permute.xlu0 %532
  %534 = vrot.lane.b32.xlu0 %v528, 87
  %v535 = vpop.permute.xlu0 %534
  %536 = vrot.lane.b32.xlu0 %v529, 87
  %v537 = vpop.permute.xlu0 %536
  %vm538 = vcmask 711680
  %v539 = vsel %vm538, %v531, %v533
  %v540 = vsel %vm538, %v533, %v535
  %v541 = vsel %vm538, %v535, %v537
  %545 = vst [vmem:[#allocation3 + $0x60] sm:$0xe0] %v539
  %546 = vst [vmem:[#allocation3 + $0x68] sm:$0xe0] %v540
  %547 = vst [vmem:[#allocation3 + $0x70] sm:$0xe0] %v541
  %v548 = vld [vmem:[#allocation2] sm:$0x38]
  %v549 = vld [vmem:[#allocation2 + $0x8] sm:$0x38]
  %v550 = vld [vmem:[#allocation2 + $0x10] sm:$0x38]
  %v551 = vld [vmem:[#allocation2 + $0x18] sm:$0x38]
  %v556 = vrot.slane %v548, 6
  %v557 = vrot.slane %v549, 6
  %v558 = vrot.slane %v550, 6
  %v559 = vrot.slane %v551, 6
  %560 = vrot.lane.b32.xlu0 %v556, 87
  %v561 = vpop.permute.xlu0 %560
  %562 = vrot.lane.b32.xlu0 %v557, 87
  %v563 = vpop.permute.xlu0 %562
  %564 = vrot.lane.b32.xlu0 %v558, 87
  %v565 = vpop.permute.xlu0 %564
  %566 = vrot.lane.b32.xlu0 %v559, 87
  %v567 = vpop.permute.xlu0 %566
  %v568 = vsel %vm538, %v561, %v563
  %v569 = vsel %vm538, %v563, %v565
  %v570 = vsel %vm538, %v565, %v567
  %574 = vst [vmem:[#allocation3 + $0x78] sm:$0xe0] %v568
  %575 = vst [vmem:[#allocation3 + $0x80] sm:$0xe0] %v569
  %576 = vst [vmem:[#allocation3 + $0x88] sm:$0xe0] %v570
  %v577 = vld [vmem:[#allocation2] sm:$0x7]
  %v578 = vld [vmem:[#allocation2 + $0x8] sm:$0x7]
  %v579 = vld [vmem:[#allocation2 + $0x10] sm:$0x7]
  %v580 = vld [vmem:[#allocation2 + $0x18] sm:$0x7]
  %585 = vrot.lane.b32.xlu0 %v577, 86
  %v586 = vpop.permute.xlu0 %585
  %587 = vrot.lane.b32.xlu0 %v578, 86
  %v588 = vpop.permute.xlu0 %587
  %589 = vrot.lane.b32.xlu0 %v579, 86
  %v590 = vpop.permute.xlu0 %589
  %591 = vrot.lane.b32.xlu0 %v580, 86
  %v592 = vpop.permute.xlu0 %591
  %vm593 = vcmask 703488
  %v594 = vsel %vm593, %v586, %v588
  %v595 = vsel %vm593, %v588, %v590
  %v596 = vsel %vm593, %v590, %v592
  %600 = vst [vmem:[#allocation3 + $0x90] sm:$0x7] %v594
  %601 = vst [vmem:[#allocation3 + $0x98] sm:$0x7] %v595
  %602 = vst [vmem:[#allocation3 + $0xa0] sm:$0x7] %v596
  %v603 = vld [vmem:[#allocation2] sm:$0x38]
  %v604 = vld [vmem:[#allocation2 + $0x8] sm:$0x38]
  %v605 = vld [vmem:[#allocation2 + $0x10] sm:$0x38]
  %v606 = vld [vmem:[#allocation2 + $0x18] sm:$0x38]
  %v611 = vrot.slane %v603, 3
  %v612 = vrot.slane %v604, 3
  %v613 = vrot.slane %v605, 3
  %v614 = vrot.slane %v606, 3
  %615 = vrot.lane.b32.xlu0 %v611, 86
  %v616 = vpop.permute.xlu0 %615
  %617 = vrot.lane.b32.xlu0 %v612, 86
  %v618 = vpop.permute.xlu0 %617
  %619 = vrot.lane.b32.xlu0 %v613, 86
  %v620 = vpop.permute.xlu0 %619
  %621 = vrot.lane.b32.xlu0 %v614, 86
  %v622 = vpop.permute.xlu0 %621
  %v623 = vsel %vm593, %v616, %v618
  %v624 = vsel %vm593, %v618, %v620
  %v625 = vsel %vm593, %v620, %v622
  %629 = vst [vmem:[#allocation3 + $0xa8] sm:$0x7] %v623
  %630 = vst [vmem:[#allocation3 + $0xb0] sm:$0x7] %v624
  %631 = vst [vmem:[#allocation3 + $0xb8] sm:$0x7] %v625
  %v632 = vld [vmem:[%s1] sm:$0x3f]
  %v633 = vld [vmem:[#allocation3] sm:$0xff]
  %v634 = vld [vmem:[#allocation3 + $0x8] sm:$0xff]
  %v635 = vld [vmem:[#allocation3 + $0x10] sm:$0xff]
  %v636 = vld [vmem:[#allocation3 + $0x18] sm:$0xff]
  %v637 = vld [vmem:[#allocation3 + $0x20] sm:$0xff]
  %v638 = vld [vmem:[#allocation3 + $0x28] sm:$0xff]
  %v639 = vld [vmem:[#allocation3 + $0x30] sm:$0xff]
  %v640 = vld [vmem:[#allocation3 + $0x38] sm:$0xff]
  %v641 = vld [vmem:[#allocation3 + $0x40] sm:$0xff]
  %v642 = vld [vmem:[#allocation3 + $0x48] sm:$0xff]
  %v643 = vld [vmem:[#allocation3 + $0x50] sm:$0xff]
  %v644 = vld [vmem:[#allocation3 + $0x58] sm:$0xff]
  %v645 = vld [vmem:[#allocation3 + $0x60] sm:$0xff]
  %v646 = vld [vmem:[#allocation3 + $0x68] sm:$0xff]
  %v647 = vld [vmem:[#allocation3 + $0x70] sm:$0xff]
  %v648 = vld [vmem:[#allocation3 + $0x78] sm:$0xff]
  %v649 = vld [vmem:[#allocation3 + $0x80] sm:$0xff]
  %v650 = vld [vmem:[#allocation3 + $0x88] sm:$0xff]
  %v651 = vld [vmem:[#allocation3 + $0x90] sm:$0x7]
  %v652 = vld [vmem:[#allocation3 + $0x98] sm:$0x7]
  %v653 = vld [vmem:[#allocation3 + $0xa0] sm:$0x7]
  %v654 = vld [vmem:[#allocation3 + $0xa8] sm:$0x7]
  %v655 = vld [vmem:[#allocation3 + $0xb0] sm:$0x7]
  %v656 = vld [vmem:[#allocation3 + $0xb8] sm:$0x7]
  %vm657 = vcmask 220160
  %v659 = vsel %vm657, %v632, 0
  %vm661 = vcmask 1042432
  %v663 = vsel %vm661, %v651, 0
  %v666 = vsel %vm661, %v652, 0
  %v669 = vsel %vm661, %v653, 0
  %v672 = vsel %vm661, %v654, 0
  %v675 = vsel %vm661, %v655, 0
  %v678 = vsel %vm661, %v656, 0
  %680 = vmatprep.subr.mxu0 0.0
  %681 = vmatpush1.msra.mxu0 0.0
  %682 = vmatprep.subr.mxu0 0.0
  %683 = vmatpush1.msra.mxu0 0.0
  %684 = vmatprep.subr.mxu0 0.0
  %685 = vmatpush1.msra.mxu0 0.0
  %686 = vmatprep.subr.mxu0 0.0
  %687 = vmatpush1.msra.mxu0 0.0
  %688 = vmatprep.subr.mxu0 0.0
  %689 = vmatpush1.msra.mxu0 0.0
  %690 = vmatprep.subr.mxu0 0.0
  %691 = vmatpush1.msra.mxu0 0.0
  %692 = vmatprep.subr.mxu0 0.0
  %693 = vmatpush1.msra.mxu0 0.0
  %694 = vmatprep.subr.mxu0 0.0
  %695 = vmatpush1.msra.mxu0 0.0
  %696 = vmatprep.subr.mxu0 0.0
  %697 = vmatpush1.msra.mxu0 0.0
  %698 = vmatprep.subr.mxu0 0.0
  %699 = vmatpush1.msra.mxu0 0.0
  %700 = vmatprep.subr.mxu0 0.0
  %701 = vmatpush1.msra.mxu0 0.0
  %702 = vmatprep.subr.mxu0 0.0
  %703 = vmatpush1.msra.mxu0 0.0
  %704 = vmatprep.subr.mxu0 %v666
  %705 = vmatpush1.msra.mxu0 %v663
  %706 = vmatprep.subr.mxu0 %v646
  %707 = vmatpush1.msra.mxu0 %v645
  %708 = vmatprep.subr.mxu0 %v640
  %709 = vmatpush1.msra.mxu0 %v639
  %710 = vmatprep.subr.mxu0 %v634
  %711 = vmatpush1.msra.mxu0 %v633
  %712 = vmatprep.subr.mxu0 0.0
  %713 = vmatpush2.msra.mxu0 0.0
  %714 = vmatprep.subr.mxu0 0.0
  %715 = vmatpush2.msra.mxu0 0.0
  %716 = vmatprep.subr.mxu0 0.0
  %717 = vmatpush2.msra.mxu0 0.0
  %718 = vmatprep.subr.mxu0 0.0
  %719 = vmatpush2.msra.mxu0 0.0
  %720 = vmatprep.subr.mxu0 0.0
  %721 = vmatpush2.msra.mxu0 0.0
  %722 = vmatprep.subr.mxu0 0.0
  %723 = vmatpush2.msra.mxu0 0.0
  %724 = vmatprep.subr.mxu0 0.0
  %725 = vmatpush2.msra.mxu0 0.0
  %726 = vmatprep.subr.mxu0 0.0
  %727 = vmatpush2.msra.mxu0 0.0
  %728 = vmatprep.subr.mxu0 0.0
  %729 = vmatpush2.msra.mxu0 0.0
  %730 = vmatprep.subr.mxu0 0.0
  %731 = vmatpush2.msra.mxu0 0.0
  %732 = vmatprep.subr.mxu0 0.0
  %733 = vmatpush2.msra.mxu0 0.0
  %734 = vmatprep.subr.mxu0 0.0
  %735 = vmatpush2.msra.mxu0 0.0
  %736 = vmatprep.subr.mxu0 0.0
  %737 = vmatpush2.msra.mxu0 0.0
  %738 = vmatprep.subr.mxu0 0.0
  %739 = vmatpush2.msra.mxu0 0.0
  %740 = vmatprep.subr.mxu0 0.0
  %741 = vmatpush2.msra.mxu0 0.0
  %742 = vmatprep.subr.mxu0 0.0
  %743 = vmatpush2.msra.mxu0 0.0
  %744 = vmatprep.mubr.f32.mxu0 0.0
  %745 = vmatmul.mubr.f32.gmra.mxu0 %v659
  %v746 = vpop.f32.mrf.mxu0
  %v747 = vadd.f32 0.0, %v746
  %v748 = vpop.f32.mrf.mxu0
  %v749 = vadd.f32 0.0, %v748
  %750 = vdwg.mxu0
  %751 = vmatprep.subr.mxu0 0.0
  %752 = vmatpush1.msra.mxu0 0.0
  %753 = vmatprep.subr.mxu0 0.0
  %754 = vmatpush1.msra.mxu0 0.0
  %755 = vmatprep.subr.mxu0 0.0
  %756 = vmatpush1.msra.mxu0 0.0
  %757 = vmatprep.subr.mxu0 0.0
  %758 = vmatpush1.msra.mxu0 0.0
  %759 = vmatprep.subr.mxu0 0.0
  %760 = vmatpush1.msra.mxu0 0.0
  %761 = vmatprep.subr.mxu0 0.0
  %762 = vmatpush1.msra.mxu0 0.0
  %763 = vmatprep.subr.mxu0 0.0
  %764 = vmatpush1.msra.mxu0 0.0
  %765 = vmatprep.subr.mxu0 0.0
  %766 = vmatpush1.msra.mxu0 0.0
  %767 = vmatprep.subr.mxu0 0.0
  %768 = vmatpush1.msra.mxu0 0.0
  %769 = vmatprep.subr.mxu0 0.0
  %770 = vmatpush1.msra.mxu0 0.0
  %771 = vmatprep.subr.mxu0 0.0
  %772 = vmatpush1.msra.mxu0 0.0
  %773 = vmatprep.subr.mxu0 0.0
  %774 = vmatpush1.msra.mxu0 0.0
  %775 = vmatprep.subr.mxu0 %v672
  %776 = vmatpush1.msra.mxu0 %v669
  %777 = vmatprep.subr.mxu0 %v648
  %778 = vmatpush1.msra.mxu0 %v647
  %779 = vmatprep.subr.mxu0 %v642
  %780 = vmatpush1.msra.mxu0 %v641
  %781 = vmatprep.subr.mxu0 %v636
  %782 = vmatpush1.msra.mxu0 %v635
  %783 = vmatprep.subr.mxu0 0.0
  %784 = vmatpush2.msra.mxu0 0.0
  %785 = vmatprep.subr.mxu0 0.0
  %786 = vmatpush2.msra.mxu0 0.0
  %787 = vmatprep.subr.mxu0 0.0
  %788 = vmatpush2.msra.mxu0 0.0
  %789 = vmatprep.subr.mxu0 0.0
  %790 = vmatpush2.msra.mxu0 0.0
  %791 = vmatprep.subr.mxu0 0.0
  %792 = vmatpush2.msra.mxu0 0.0
  %793 = vmatprep.subr.mxu0 0.0
  %794 = vmatpush2.msra.mxu0 0.0
  %795 = vmatprep.subr.mxu0 0.0
  %796 = vmatpush2.msra.mxu0 0.0
  %797 = vmatprep.subr.mxu0 0.0
  %798 = vmatpush2.msra.mxu0 0.0
  %799 = vmatprep.subr.mxu0 0.0
  %800 = vmatpush2.msra.mxu0 0.0
  %801 = vmatprep.subr.mxu0 0.0
  %802 = vmatpush2.msra.mxu0 0.0
  %803 = vmatprep.subr.mxu0 0.0
  %804 = vmatpush2.msra.mxu0 0.0
  %805 = vmatprep.subr.mxu0 0.0
  %806 = vmatpush2.msra.mxu0 0.0
  %807 = vmatprep.subr.mxu0 0.0
  %808 = vmatpush2.msra.mxu0 0.0
  %809 = vmatprep.subr.mxu0 0.0
  %810 = vmatpush2.msra.mxu0 0.0
  %811 = vmatprep.subr.mxu0 0.0
  %812 = vmatpush2.msra.mxu0 0.0
  %813 = vmatprep.subr.mxu0 0.0
  %814 = vmatpush2.msra.mxu0 0.0
  %815 = vmatprep.mubr.f32.mxu0 0.0
  %816 = vmatmul.mubr.f32.gmra.mxu0 %v659
  %v817 = vpop.f32.mrf.mxu0
  %v818 = vadd.f32 0.0, %v817
  %v819 = vpop.f32.mrf.mxu0
  %v820 = vadd.f32 0.0, %v819
  %821 = vdwg.mxu0
  %822 = vmatprep.subr.mxu0 0.0
  %823 = vmatpush1.msra.mxu0 0.0
  %824 = vmatprep.subr.mxu0 0.0
  %825 = vmatpush1.msra.mxu0 0.0
  %826 = vmatprep.subr.mxu0 0.0
  %827 = vmatpush1.msra.mxu0 0.0
  %828 = vmatprep.subr.mxu0 0.0
  %829 = vmatpush1.msra.mxu0 0.0
  %830 = vmatprep.subr.mxu0 0.0
  %831 = vmatpush1.msra.mxu0 0.0
  %832 = vmatprep.subr.mxu0 0.0
  %833 = vmatpush1.msra.mxu0 0.0
  %834 = vmatprep.subr.mxu0 0.0
  %835 = vmatpush1.msra.mxu0 0.0
  %836 = vmatprep.subr.mxu0 0.0
  %837 = vmatpush1.msra.mxu0 0.0
  %838 = vmatprep.subr.mxu0 0.0
  %839 = vmatpush1.msra.mxu0 0.0
  %840 = vmatprep.subr.mxu0 0.0
  %841 = vmatpush1.msra.mxu0 0.0
  %842 = vmatprep.subr.mxu0 0.0
  %843 = vmatpush1.msra.mxu0 0.0
  %844 = vmatprep.subr.mxu0 0.0
  %845 = vmatpush1.msra.mxu0 0.0
  %846 = vmatprep.subr.mxu0 %v678
  %847 = vmatpush1.msra.mxu0 %v675
  %848 = vmatprep.subr.mxu0 %v650
  %849 = vmatpush1.msra.mxu0 %v649
  %850 = vmatprep.subr.mxu0 %v644
  %851 = vmatpush1.msra.mxu0 %v643
  %852 = vmatprep.subr.mxu0 %v638
  %853 = vmatpush1.msra.mxu0 %v637
  %854 = vmatprep.subr.mxu0 0.0
  %855 = vmatpush2.msra.mxu0 0.0
  %856 = vmatprep.subr.mxu0 0.0
  %857 = vmatpush2.msra.mxu0 0.0
  %858 = vmatprep.subr.mxu0 0.0
  %859 = vmatpush2.msra.mxu0 0.0
  %860 = vmatprep.subr.mxu0 0.0
  %861 = vmatpush2.msra.mxu0 0.0
  %862 = vmatprep.subr.mxu0 0.0
  %863 = vmatpush2.msra.mxu0 0.0
  %864 = vmatprep.subr.mxu0 0.0
  %865 = vmatpush2.msra.mxu0 0.0
  %866 = vmatprep.subr.mxu0 0.0
  %867 = vmatpush2.msra.mxu0 0.0
  %868 = vmatprep.subr.mxu0 0.0
  %869 = vmatpush2.msra.mxu0 0.0
  %870 = vmatprep.subr.mxu0 0.0
  %871 = vmatpush2.msra.mxu0 0.0
  %872 = vmatprep.subr.mxu0 0.0
  %873 = vmatpush2.msra.mxu0 0.0
  %874 = vmatprep.subr.mxu0 0.0
  %875 = vmatpush2.msra.mxu0 0.0
  %876 = vmatprep.subr.mxu0 0.0
  %877 = vmatpush2.msra.mxu0 0.0
  %878 = vmatprep.subr.mxu0 0.0
  %879 = vmatpush2.msra.mxu0 0.0
  %880 = vmatprep.subr.mxu0 0.0
  %881 = vmatpush2.msra.mxu0 0.0
  %882 = vmatprep.subr.mxu0 0.0
  %883 = vmatpush2.msra.mxu0 0.0
  %884 = vmatprep.subr.mxu0 0.0
  %885 = vmatpush2.msra.mxu0 0.0
  %886 = vmatprep.mubr.f32.mxu0 0.0
  %887 = vmatmul.mubr.f32.gmra.mxu0 %v659
  %v888 = vpop.f32.mrf.mxu0
  %v889 = vadd.f32 0.0, %v888
  %v890 = vpop.f32.mrf.mxu0
  %v891 = vadd.f32 0.0, %v890
  %892 = vdwg.mxu0
  %v893 = vld [vmem:[%s2] sm:$0x3f]
  %895 = vset.pattern.permute.xlu0 0
  %896 = vperm.xlu0 %895, %v893
  %v897 = vpop.permute.xlu0 %896
  %v899 = vadd.f32 %v747, %v897
  %v900 = vadd.f32 %v749, %v897
  %v901 = vadd.f32 %v818, %v897
  %902 = vst [vmem:[%s3] sm:$0x3f] %v899
  %903 = vst [vmem:[%s3 + $0x8] sm:$0x3f] %v900
  %904 = vst [vmem:[%s3 + $0x10] sm:$0x3f] %v901
  %v905 = vld [vmem:[%s2] sm:$0x3f]
  %907 = vset.pattern.permute.xlu0 0
  %908 = vperm.xlu0 %907, %v905
  %v909 = vpop.permute.xlu0 %908
  %v911 = vadd.f32 %v820, %v909
  %v912 = vadd.f32 %v889, %v909
  %v913 = vadd.f32 %v891, %v909
  %s914 = scalar_lea.vmem %s3, 24
  %915 = vst [vmem:[%s914] sm:$0x3f] %v911
  %916 = vst [vmem:[%s914 + $0x8] sm:$0x3f] %v912
  %917 = vst [vmem:[%s914 + $0x10] sm:$0x3f] %v913
  // Predicated region
  $region14: #{conv_transpose2d.1} parent=0 // pred_check
    _
  $region15: #{conv_transpose2d.1} parent=0 // pred_check_branch
    %919 = sbr.rel (0) target = $region17
  $region16: #{conv_transpose2d.1} parent=0 // pred_region
    _
  $region17: #{conv_transpose2d.1} parent=0 // pred_fallthru
    _
  // Predicated region
  $region18: #{conv_transpose2d.1} parent=0 // pred_check
    _
  $region19: #{conv_transpose2d.1} parent=0 // pred_check_branch
    %921 = sbr.rel (0) target = $region21
  $region20: #{conv_transpose2d.1} parent=0 // pred_region
    _
  $region21: #{conv_transpose2d.1} parent=0 // pred_fallthru
    _

</llo_original>
